<compile_context>
chip_gen: v6e
topology: v6e:2x2x1
jax: 0.10.0
libtpu: 0.0.40
codegen_flags: <defaults>
</compile_context>

<pallas_src>
import functools
import math

import jax
import jax.numpy as jnp
from jax.experimental import pallas as pl
from jax.experimental.pallas import tpu as pltpu

_VMEM_LIMIT = 64 * 1024 * 1024          # raise scoped-VMEM default for large tiles
_GELU_C = math.sqrt(2.0 / math.pi)      # GELU(approximate='tanh') constant


def _pick_tile(n: int, max_tile: int, align: int) -> int:
    """Largest divisor of n that is <= max_tile and a multiple of `align`.

    Falls back to the full dimension (always a legal block shape), so no
    padding / slicing of activations is ever needed around the pallas_call.
    """
    if n <= max_tile:
        return n
    start = max_tile - (max_tile % align)
    for t in range(start, 0, -align):
        if n % t == 0:
            return t
    return n


# ---------------------------------------------------------------------------
# Kernel 1: RMSNorm fused into a Linear (+bias).  Used for input_layernorm+qkv.
# ---------------------------------------------------------------------------
def _rmsnorm_linear_kernel(x_ref, nw_ref, w_ref, b_ref, o_ref, *, eps, inv_h):
    x = x_ref[...].astype(jnp.float32)
    ms = jnp.sum(x * x, axis=-1, keepdims=True) * inv_h       # mean(x^2) as sum * 1/H
    xn = x * jax.lax.rsqrt(ms + eps) * nw_ref[...].astype(jnp.float32)
    y = jnp.dot(xn, w_ref[...].astype(jnp.float32),
                preferred_element_type=jnp.float32)
    o_ref[...] = (y + b_ref[...].astype(jnp.float32)).astype(o_ref.dtype)


def rmsnorm_linear(x2d, norm_w, w, b, *, eps, max_rows=256, max_cols=512):
    R, H = x2d.shape
    N = w.shape[1]
    tr = _pick_tile(R, max_rows, 8)
    tn = _pick_tile(N, max_cols, 128)
    kernel = functools.partial(_rmsnorm_linear_kernel, eps=eps, inv_h=1.0 / H)
    return pl.pallas_call(
        kernel,
        out_shape=jax.ShapeDtypeStruct((R, N), x2d.dtype),
        grid_spec=pltpu.PrefetchScalarGridSpec(
            num_scalar_prefetch=0,
            grid=(R // tr, N // tn),
            in_specs=[
                pl.BlockSpec((tr, H), lambda i, j: (i, 0)),
                pl.BlockSpec((1, H), lambda i, j: (0, 0)),
                pl.BlockSpec((H, tn), lambda i, j: (0, j)),
                pl.BlockSpec((1, tn), lambda i, j: (0, j)),
            ],
            out_specs=pl.BlockSpec((tr, tn), lambda i, j: (i, j)),
        ),
        compiler_params=pltpu.CompilerParams(
            dimension_semantics=("parallel", "parallel"),
            vmem_limit_bytes=_VMEM_LIMIT),
    )(x2d, norm_w.reshape(1, H), w, b.reshape(1, N))


# ---------------------------------------------------------------------------
# Kernel 2: RMSNorm fused into gate_proj / up_proj + tanh-GELU (MLP front half).
# ---------------------------------------------------------------------------
def _rmsnorm_gateup_gelu_kernel(x_ref, nw_ref, wg_ref, bg_ref, wu_ref, bu_ref,
                                o_ref, *, eps, inv_h):
    x = x_ref[...].astype(jnp.float32)
    ms = jnp.sum(x * x, axis=-1, keepdims=True) * inv_h
    xn = x * jax.lax.rsqrt(ms + eps) * nw_ref[...].astype(jnp.float32)
    gate = jnp.dot(xn, wg_ref[...].astype(jnp.float32),
                   preferred_element_type=jnp.float32) + bg_ref[...].astype(jnp.float32)
    up = jnp.dot(xn, wu_ref[...].astype(jnp.float32),
                 preferred_element_type=jnp.float32) + bu_ref[...].astype(jnp.float32)
    g = 0.5 * gate * (1.0 + jnp.tanh(_GELU_C * (gate + 0.044715 * gate * gate * gate)))
    o_ref[...] = (g * up).astype(o_ref.dtype)


def rmsnorm_gateup_gelu(x2d, norm_w, wg, bg, wu, bu, *, eps,
                        max_rows=256, max_cols=512):
    R, H = x2d.shape
    N = wg.shape[1]
    tr = _pick_tile(R, max_rows, 8)
    tn = _pick_tile(N, max_cols, 128)
    kernel = functools.partial(_rmsnorm_gateup_gelu_kernel, eps=eps, inv_h=1.0 / H)
    return pl.pallas_call(
        kernel,
        out_shape=jax.ShapeDtypeStruct((R, N), x2d.dtype),
        grid_spec=pltpu.PrefetchScalarGridSpec(
            num_scalar_prefetch=0,
            grid=(R // tr, N // tn),
            in_specs=[
                pl.BlockSpec((tr, H), lambda i, j: (i, 0)),
                pl.BlockSpec((1, H), lambda i, j: (0, 0)),
                pl.BlockSpec((H, tn), lambda i, j: (0, j)),
                pl.BlockSpec((1, tn), lambda i, j: (0, j)),
                pl.BlockSpec((H, tn), lambda i, j: (0, j)),
                pl.BlockSpec((1, tn), lambda i, j: (0, j)),
            ],
            out_specs=pl.BlockSpec((tr, tn), lambda i, j: (i, j)),
        ),
        compiler_params=pltpu.CompilerParams(
            dimension_semantics=("parallel", "parallel"),
            vmem_limit_bytes=_VMEM_LIMIT),
    )(x2d, norm_w.reshape(1, H), wg, bg.reshape(1, N), wu, bu.reshape(1, N))


# ---------------------------------------------------------------------------
# Kernel 3: Linear + bias + residual add, K-tiled with a VMEM accumulator.
# Used for o_proj (+ first residual) and down_proj (+ second residual).
# ---------------------------------------------------------------------------
def _linear_bias_residual_kernel(x_ref, w_ref, b_ref, r_ref, o_ref, acc_ref):
    @pl.when(pl.program_id(2) == 0)
    def _():
        acc_ref[...] = jnp.zeros_like(acc_ref)

    acc_ref[...] += jnp.dot(x_ref[...].astype(jnp.float32),
                            w_ref[...].astype(jnp.float32),
                            preferred_element_type=jnp.float32)

    @pl.when(pl.program_id(2) == pl.num_programs(2) - 1)
    def _():
        o_ref[...] = (acc_ref[...] + b_ref[...].astype(jnp.float32)
                      + r_ref[...].astype(jnp.float32)).astype(o_ref.dtype)


def linear_bias_residual(x2d, w, b, residual, *, max_rows=256, max_cols=512,
                         max_k=512):
    R, K = x2d.shape
    N = w.shape[1]
    tr = _pick_tile(R, max_rows, 8)
    tn = _pick_tile(N, max_cols, 128)
    tk = _pick_tile(K, max_k, 128)
    return pl.pallas_call(
        _linear_bias_residual_kernel,
        out_shape=jax.ShapeDtypeStruct((R, N), x2d.dtype),
        grid_spec=pltpu.PrefetchScalarGridSpec(
            num_scalar_prefetch=0,
            grid=(R // tr, N // tn, K // tk),
            in_specs=[
                pl.BlockSpec((tr, tk), lambda i, j, k: (i, k)),
                pl.BlockSpec((tk, tn), lambda i, j, k: (k, j)),
                pl.BlockSpec((1, tn), lambda i, j, k: (0, j)),
                pl.BlockSpec((tr, tn), lambda i, j, k: (i, j)),
            ],
            out_specs=pl.BlockSpec((tr, tn), lambda i, j, k: (i, j)),
            scratch_shapes=[pltpu.VMEM((tr, tn), jnp.float32)],
        ),
        compiler_params=pltpu.CompilerParams(
            dimension_semantics=("parallel", "parallel", "arbitrary"),
            vmem_limit_bytes=_VMEM_LIMIT),
    )(x2d, w, b.reshape(1, N), residual)


# ---------------------------------------------------------------------------
# Kernel 4: RoPE + causal self-attention, one (batch, head) per grid step.
# rotate_half is done as a matmul with a signed half-swap matrix (MXU-friendly,
# no in-kernel lane slicing/concat).  Also emits the rotated keys (KV cache).
# ---------------------------------------------------------------------------
def _rope_causal_attention_kernel(q_ref, k_ref, v_ref, cos_ref, sin_ref, rot_ref,
                                  o_ref, k_out_ref, *, scale):
    f32 = jnp.float32
    q = q_ref[0].astype(f32)                 # (S, D)
    k = k_ref[0].astype(f32)
    v = v_ref[0].astype(f32)
    cos = cos_ref[...].astype(f32)           # (S, D)
    sin = sin_ref[...].astype(f32)
    rot = rot_ref[...].astype(f32)           # (D, D): x @ rot == rotate_half(x)

    q = q * cos + jnp.dot(q, rot, preferred_element_type=f32) * sin
    k = k * cos + jnp.dot(k, rot, preferred_element_type=f32) * sin

    s = jax.lax.dot_general(q, k, (((1,), (1,)), ((), ())),
                            preferred_element_type=f32) * scale   # (S, S)
    S = s.shape[0]
    row = jax.lax.broadcasted_iota(jnp.int32, (S, S), 0)
    col = jax.lax.broadcasted_iota(jnp.int32, (S, S), 1)
    s = jnp.where(col <= row, s, -1e30)                            # causal mask
    m = jnp.max(s, axis=-1, keepdims=True)
    p = jnp.exp(s - m)
    o = jnp.dot(p, v, preferred_element_type=f32) / jnp.sum(p, axis=-1, keepdims=True)

    o_ref[0] = o.astype(o_ref.dtype)
    k_out_ref[0] = k.astype(k_out_ref.dtype)


def rope_causal_attention(qh, kh, vh, cos, sin, rot, *, scale):
    # TODO(synk): for production sequence lengths use a flash-style KV tiling;
    # this kernel keeps the full (S, S) score tile per head (fine for short S).
    BH, S, D = qh.shape
    kernel = functools.partial(_rope_causal_attention_kernel, scale=scale)
    return pl.pallas_call(
        kernel,
        out_shape=(jax.ShapeDtypeStruct((BH, S, D), qh.dtype),
                   jax.ShapeDtypeStruct((BH, S, D), qh.dtype)),
        grid_spec=pltpu.PrefetchScalarGridSpec(
            num_scalar_prefetch=0,
            grid=(BH,),
            in_specs=[
                pl.BlockSpec((1, S, D), lambda i: (i, 0, 0)),
                pl.BlockSpec((1, S, D), lambda i: (i, 0, 0)),
                pl.BlockSpec((1, S, D), lambda i: (i, 0, 0)),
                pl.BlockSpec((S, D), lambda i: (0, 0)),
                pl.BlockSpec((S, D), lambda i: (0, 0)),
                pl.BlockSpec((D, D), lambda i: (0, 0)),
            ],
            out_specs=[
                pl.BlockSpec((1, S, D), lambda i: (i, 0, 0)),
                pl.BlockSpec((1, S, D), lambda i: (i, 0, 0)),
            ],
        ),
        compiler_params=pltpu.CompilerParams(
            dimension_semantics=("parallel",),
            vmem_limit_bytes=_VMEM_LIMIT),
    )(qh, kh, vh, cos, sin, rot)


# ---------------------------------------------------------------------------
# Full decoder-layer forward (prefill path: no past_key_value, no attn mask).
# ---------------------------------------------------------------------------
def phi_mini_decoder_layer(hidden_states, params, *, num_heads, eps, rope_theta):
    B, S, H = hidden_states.shape
    d = H // num_heads
    x2d = hidden_states.reshape(B * S, H)

    # input_layernorm fused into qkv_proj
    qkv = rmsnorm_linear(x2d, params["input_ln_w"], params["qkv_w"],
                         params["qkv_b"], eps=eps)
    q, k, v = jnp.split(qkv, 3, axis=-1)

    def to_heads(t):
        return (t.reshape(B, S, num_heads, d)
                 .transpose(0, 2, 1, 3)
                 .reshape(B * num_heads, S, d))

    qh, kh, vh = to_heads(q), to_heads(k), to_heads(v)

    # RoPE tables (PhiMiniRotaryEmbedding with position_ids = arange(S))
    inv_freq = 1.0 / (rope_theta ** (jnp.arange(0, d, 2, dtype=jnp.float32) / d))
    pos = jnp.arange(S, dtype=jnp.float32)
    freqs = jnp.outer(pos, inv_freq)
    emb = jnp.concatenate([freqs, freqs], axis=-1)
    cos = jnp.cos(emb).astype(hidden_states.dtype)
    sin = jnp.sin(emb).astype(hidden_states.dtype)

    # rotate_half(x) == x @ rot  (signed half-swap matrix)
    half = d // 2
    rot = jnp.zeros((d, d), jnp.float32)
    rot = rot.at[jnp.arange(half) + half, jnp.arange(half)].set(-1.0)
    rot = rot.at[jnp.arange(half), jnp.arange(half) + half].set(1.0)

    attn_heads, k_rope = rope_causal_attention(qh, kh, vh, cos, sin, rot,
                                               scale=1.0 / math.sqrt(d))
    attn2d = (attn_heads.reshape(B, num_heads, S, d)
                        .transpose(0, 2, 1, 3)
                        .reshape(B * S, H))

    # o_proj + first residual add
    h1 = linear_bias_residual(attn2d, params["o_w"], params["o_b"], x2d)

    # post_attention_layernorm fused into gate/up proj + tanh-GELU
    inter = rmsnorm_gateup_gelu(h1, params["post_ln_w"],
                                params["gate_w"], params["gate_b"],
                                params["up_w"], params["up_b"], eps=eps)

    # down_proj + second residual add
    out2d = linear_bias_residual(inter, params["down_w"], params["down_b"], h1)

    present_kv = (k_rope.reshape(B, num_heads, S, d),
                  vh.reshape(B, num_heads, S, d))
    return out2d.reshape(B, S, H), present_kv


# ---------------------------------------------------------------------------
# Pure-JAX reference mirroring the PyTorch forward (prefill path).
# ---------------------------------------------------------------------------
def phi_mini_decoder_layer_ref(hidden_states, params, *, num_heads, eps, rope_theta):
    dtype = hidden_states.dtype
    B, S, H = hidden_states.shape
    d = H // num_heads

    def rmsnorm(x, w):
        xf = x.astype(jnp.float32)
        var = jnp.mean(xf * xf, axis=-1, keepdims=True)
        return (w.astype(jnp.float32) * (xf * jax.lax.rsqrt(var + eps))).astype(dtype)

    residual = hidden_states
    x = rmsnorm(hidden_states, params["input_ln_w"])
    qkv = x @ params["qkv_w"] + params["qkv_b"]
    q, k, v = jnp.split(qkv, 3, axis=-1)

    def heads(t):
        return t.reshape(B, S, num_heads, d).transpose(0, 2, 1, 3)

    q, k, v = heads(q), heads(k), heads(v)

    inv_freq = 1.0 / (rope_theta ** (jnp.arange(0, d, 2, dtype=jnp.float32) / d))
    pos = jnp.arange(S, dtype=jnp.float32)
    emb = jnp.concatenate([jnp.outer(pos, inv_freq)] * 2, axis=-1)
    cos = jnp.cos(emb)[None, None].astype(dtype)
    sin = jnp.sin(emb)[None, None].astype(dtype)

    def rotate_half(t):
        h = t.shape[-1] // 2
        return jnp.concatenate([-t[..., h:], t[..., :h]], axis=-1)

    q = q * cos + rotate_half(q) * sin
    k = k * cos + rotate_half(k) * sin

    scale = 1.0 / math.sqrt(d)
    s = jnp.einsum("bhqd,bhkd->bhqk", q, k) * scale
    causal = jnp.tril(jnp.ones((S, S), dtype=bool))
    s = jnp.where(causal, s, -jnp.inf)
    p = jax.nn.softmax(s, axis=-1)
    o = jnp.einsum("bhqk,bhkd->bhqd", p, v)
    o = o.transpose(0, 2, 1, 3).reshape(B, S, H)
    attn_out = o @ params["o_w"] + params["o_b"]

    h1 = residual + attn_out
    xn = rmsnorm(h1, params["post_ln_w"])
    gate = xn @ params["gate_w"] + params["gate_b"]
    up = xn @ params["up_w"] + params["up_b"]
    g = 0.5 * gate * (1.0 + jnp.tanh(_GELU_C * (gate + 0.044715 * gate ** 3)))
    mlp = (g * up) @ params["down_w"] + params["down_b"]
    return h1 + mlp, k, v


if __name__ == "__main__":
    key = jax.random.PRNGKey(0)
    batch, seq, hidden, num_heads, intermediate = 2, 8, 32, 4, 64
    eps, rope_theta = 1e-6, 10000.0

    keys = jax.random.split(key, 9)

    def lin(k_, fan_in, fan_out):
        kw, kb = jax.random.split(k_)
        w = jax.random.normal(kw, (fan_in, fan_out), jnp.float32) / math.sqrt(fan_in)
        b = 0.02 * jax.random.normal(kb, (fan_out,), jnp.float32)
        return w, b

    qkv_w, qkv_b = lin(keys[0], hidden, 3 * hidden)
    o_w, o_b = lin(keys[1], hidden, hidden)
    gate_w, gate_b = lin(keys[2], hidden, intermediate)
    up_w, up_b = lin(keys[3], hidden, intermediate)
    down_w, down_b = lin(keys[4], intermediate, hidden)

    params = {
        "input_ln_w": 1.0 + 0.1 * jax.random.normal(keys[5], (hidden,), jnp.float32),
        "post_ln_w": 1.0 + 0.1 * jax.random.normal(keys[6], (hidden,), jnp.float32),
        "qkv_w": qkv_w, "qkv_b": qkv_b,
        "o_w": o_w, "o_b": o_b,
        "gate_w": gate_w, "gate_b": gate_b,
        "up_w": up_w, "up_b": up_b,
        "down_w": down_w, "down_b": down_b,
    }

    x = jax.random.normal(keys[7], (batch, seq, hidden), dtype=jnp.float32)

    out, (k_rope, v_states) = phi_mini_decoder_layer(
        x, params, num_heads=num_heads, eps=eps, rope_theta=rope_theta)
    out = jax.block_until_ready(out)

    with jax.default_matmul_precision("float32"):
        ref_out, ref_k, ref_v = phi_mini_decoder_layer_ref(
            x, params, num_heads=num_heads, eps=eps, rope_theta=rope_theta)
        ref_out = jax.block_until_ready(ref_out)

    assert out.shape == x.shape and out.dtype == x.dtype
    assert jnp.allclose(out, ref_out, atol=2e-2, rtol=2e-2)
    assert jnp.allclose(k_rope, ref_k, atol=2e-2, rtol=2e-2)
    assert jnp.allclose(v_states, ref_v, atol=2e-2, rtol=2e-2)

    print("KERNEL_OK")
</pallas_src>

<mosaic_0001>
module attributes {stable_mosaic.version = 11 : i64} {
  func.func @_rmsnorm_linear_kernel(%arg0: i32, %arg1: i32, %arg2: memref<16x32xf32, #tpu.memory_space<vmem>>, %arg3: memref<1x32xf32, #tpu.memory_space<vmem>>, %arg4: memref<32x96xf32, #tpu.memory_space<vmem>>, %arg5: memref<1x96xf32, #tpu.memory_space<vmem>>, %arg6: memref<16x96xf32, #tpu.memory_space<vmem>>) attributes {dimension_semantics = [#tpu.dimension_semantics<parallel>, #tpu.dimension_semantics<parallel>], iteration_bounds = array<i64: 1, 1>, scalar_prefetch = 0 : i64, scratch_operands = 0 : i64, tpu.core_type = #tpu.core_type<tc>, window_params = [{transform_indices = @transform_0, window_bounds = array<i64: 16, 32>}, {pipeline_mode = #tpu.pipeline_mode<synchronous>, transform_indices = @transform_1, window_bounds = array<i64: 1, 32>}, {transform_indices = @transform_2, window_bounds = array<i64: 32, 96>}, {transform_indices = @transform_3, window_bounds = array<i64: 1, 96>}, {transform_indices = @transform_4, window_bounds = array<i64: 16, 96>}]} {
    %c0 = arith.constant 0 : index
    %c0_0 = arith.constant 0 : index
    %0 = vector.load %arg2[%c0, %c0_0] : memref<16x32xf32, #tpu.memory_space<vmem>>, vector<16x32xf32>
    %1 = arith.mulf %0, %0 : vector<16x32xf32>
    %cst = arith.constant dense<0.000000e+00> : vector<16xf32>
    %2 = vector.multi_reduction <add>, %1, %cst [1] : vector<16x32xf32> to vector<16xf32>
    %3 = vector.shape_cast %2 : vector<16xf32> to vector<16x1xf32>
    %cst_1 = arith.constant 3.125000e-02 : f32
    %4 = vector.broadcast %cst_1 : f32 to vector<16x1xf32>
    %5 = arith.mulf %3, %4 : vector<16x1xf32>
    %cst_2 = arith.constant 9.99999997E-7 : f32
    %6 = vector.broadcast %cst_2 : f32 to vector<16x1xf32>
    %7 = arith.addf %5, %6 : vector<16x1xf32>
    %8 = math.rsqrt %7 : vector<16x1xf32>
    %9 = vector.broadcast %8 : vector<16x1xf32> to vector<16x32xf32>
    %10 = arith.mulf %0, %9 : vector<16x32xf32>
    %c0_3 = arith.constant 0 : index
    %c0_4 = arith.constant 0 : index
    %11 = vector.load %arg3[%c0_3, %c0_4] : memref<1x32xf32, #tpu.memory_space<vmem>>, vector<1x32xf32>
    %12 = vector.broadcast %11 : vector<1x32xf32> to vector<16x32xf32>
    %13 = arith.mulf %10, %12 : vector<16x32xf32>
    %c0_5 = arith.constant 0 : index
    %c0_6 = arith.constant 0 : index
    %14 = vector.load %arg4[%c0_5, %c0_6] : memref<32x96xf32, #tpu.memory_space<vmem>>, vector<32x96xf32>
    %cst_7 = arith.constant dense<0.000000e+00> : vector<16x96xf32>
    %15 = tpu.matmul %13, %14, %cst_7 {dimension_numbers = #tpu.dot_dimension_numbers<[1], [0], [0], [1], [0, 0, 1, 1], [], []>} : vector<16x32xf32>, vector<32x96xf32>, vector<16x96xf32> -> vector<16x96xf32>
    %c0_8 = arith.constant 0 : index
    %c0_9 = arith.constant 0 : index
    %16 = vector.load %arg5[%c0_8, %c0_9] : memref<1x96xf32, #tpu.memory_space<vmem>>, vector<1x96xf32>
    %17 = vector.broadcast %16 : vector<1x96xf32> to vector<16x96xf32>
    %18 = arith.addf %15, %17 : vector<16x96xf32>
    %c0_10 = arith.constant 0 : index
    %c0_11 = arith.constant 0 : index
    %19 = vector.load %arg6[%c0_10, %c0_11] : memref<16x96xf32, #tpu.memory_space<vmem>>, vector<16x96xf32>
    tpu.vector_store %arg6[%c0_10, %c0_11], %18 {strides = array<i32>} : memref<16x96xf32, #tpu.memory_space<vmem>>, vector<16x96xf32>,
    return
  }
  func.func @transform_0(%arg0: i32, %arg1: i32) -> (i32, i32) {
    %c0_i32 = arith.constant 0 : i32
    %c0_i32_0 = arith.constant 0 : i32
    return %arg0, %c0_i32 : i32, i32
  }
  func.func @transform_1(%arg0: i32, %arg1: i32) -> (i32, i32) {
    %c0_i32 = arith.constant 0 : i32
    %c0_i32_0 = arith.constant 0 : i32
    %c0_i32_1 = arith.constant 0 : i32
    return %c0_i32, %c0_i32_0 : i32, i32
  }
  func.func @transform_2(%arg0: i32, %arg1: i32) -> (i32, i32) {
    %c0_i32 = arith.constant 0 : i32
    %c0_i32_0 = arith.constant 0 : i32
    return %c0_i32, %arg1 : i32, i32
  }
  func.func @transform_3(%arg0: i32, %arg1: i32) -> (i32, i32) {
    %c0_i32 = arith.constant 0 : i32
    %c0_i32_0 = arith.constant 0 : i32
    return %c0_i32, %arg1 : i32, i32
  }
  func.func @transform_4(%arg0: i32, %arg1: i32) -> (i32, i32) {
    %c0_i32 = arith.constant 0 : i32
    return %arg0, %arg1 : i32, i32
  }
}

</mosaic_0001>

<llo_original>
// kernel: tpu_custom_call.1
$region0: #{tpu_custom_call.1}
  #allocation0 [shape = 'u32[]', space=smem, size = 0x4, offset = 0x4, fixed_abs, tag = 'smem constant byte address 0x4 - core index']
  #allocation1 [shape = 'u32[144,128]{1,0:T(1,128)}', space=vmem, size = 0x12000, scoped, tag = 'internal scratch']
  %s0 = inlined_call_operand.hbm [shape: f32[16,32], index: 0, kind: input, shape index: {}]
  %s1 = inlined_call_operand.vmem [shape: f32[1,32], index: 1, kind: input, shape index: {}]
  %s2 = inlined_call_operand.hbm [shape: f32[32,96], index: 2, kind: input, shape index: {}]
  %s3 = inlined_call_operand.vmem [shape: f32[1,96], index: 3, kind: input, shape index: {}]
  %s4 = inlined_call_operand.hbm [shape: f32[16,96], index: 4, kind: output, shape index: {}]
  %s5 = sld [smem:[#allocation0]]
  $region34: #{tpu_custom_call.1} parent=0
    _
  %s7 = ssub.s32 1, %s5
  %s8 = scalar_select 0, %s7, %s5
  $region1: #{tpu_custom_call.1} parent=0
    #allocation2 [shape = 'u8[8192]{0}', space=vmem, size = 0x2000, scoped, tag = 'input window, operand 0, single buffered']
    #allocation3 [shape = 's32[1]{0}', space=sflag, size = 0x4, scoped, tag = 'scoped memory for tpu_custom_call.1']
    #allocation4 [shape = 's32[1]{0}', space=sflag, size = 0x4, scoped, tag = 'scoped memory for tpu_custom_call.1']
    #allocation5 [shape = 'u8[16384]{0}', space=vmem, size = 0x4000, scoped, tag = 'input window, operand 2, single buffered']
    #allocation6 [shape = 's32[1]{0}', space=sflag, size = 0x4, scoped, tag = 'scoped memory for tpu_custom_call.1']
    #allocation7 [shape = 'u8[8192]{0}', space=vmem, size = 0x2000, scoped, tag = 'output window, operand 0, single buffered']
    %9 = vsyncpa [#allocation3], 0
    %10 = vsyncpa [#allocation6], 0
    %11 = vsyncpa [#allocation4], 0
    // Predicated region
    $region2: #{tpu_custom_call.1} parent=1 // pred_check
      _
    $region3: #{tpu_custom_call.1} parent=1 // pred_check_branch
      %13 = sbr.rel (0) target = $region5
    $region4: #{tpu_custom_call.1} parent=1 // pred_region
      %s15 = ssub.s32 256, 256
      %16 = vsyncadd [#allocation3], %s15
      %s17 = sshll.u32 [#allocation2], 4
      %s18 = int_to_ptr.vmem [resolvable:$true] %s17
      %23 = dma.hbm_to_vmem [thread:$0]  %s0, 256, %s18, [#allocation3], 128, 128, 8
    $region5: #{tpu_custom_call.1} parent=1 // pred_fallthru
      _
    // Predicated region
    $region6: #{tpu_custom_call.1} parent=1 // pred_check
      _
    $region7: #{tpu_custom_call.1} parent=1 // pred_check_branch
      %25 = sbr.rel (0) target = $region9
    $region8: #{tpu_custom_call.1} parent=1 // pred_region
      _
    $region9: #{tpu_custom_call.1} parent=1 // pred_fallthru
      _
    // Predicated region
    $region10: #{tpu_custom_call.1} parent=1 // pred_check
      _
    $region11: #{tpu_custom_call.1} parent=1 // pred_check_branch
      %27 = sbr.rel (0) target = $region13
    $region12: #{tpu_custom_call.1} parent=1 // pred_region
      %s29 = ssub.s32 512, 512
      %30 = vsyncadd [#allocation6], %s29
      %s31 = sshll.u32 [#allocation5], 4
      %s32 = int_to_ptr.vmem [resolvable:$true] %s31
      %37 = dma.hbm_to_vmem [thread:$0]  %s2, 512, %s32, [#allocation6], 128, 128, 8
    $region13: #{tpu_custom_call.1} parent=1 // pred_fallthru
      _
    // Predicated region
    $region14: #{tpu_custom_call.1} parent=1 // pred_check
      _
    $region15: #{tpu_custom_call.1} parent=1 // pred_check_branch
      %39 = sbr.rel (0) target = $region17
    $region16: #{tpu_custom_call.1} parent=1 // pred_region
      _
    $region17: #{tpu_custom_call.1} parent=1 // pred_fallthru
      _
    // Predicated region
    $region18: #{tpu_custom_call.1} parent=1 // pred_check
      _
    $region19: #{tpu_custom_call.1} parent=1 // pred_check_branch
      %41 = sbr.rel (0) target = $region21
    $region20: #{tpu_custom_call.1} parent=1 // pred_region
      %42 = dma.done [#allocation3], 256
    $region21: #{tpu_custom_call.1} parent=1 // pred_fallthru
      _
    // Predicated region
    $region22: #{tpu_custom_call.1} parent=1 // pred_check
      _
    $region23: #{tpu_custom_call.1} parent=1 // pred_check_branch
      %44 = sbr.rel (0) target = $region25
    $region24: #{tpu_custom_call.1} parent=1 // pred_region
      %45 = dma.done [#allocation6], 512
    $region25: #{tpu_custom_call.1} parent=1 // pred_fallthru
      _
    %v46 = vld [vmem:[#allocation2] sm:$0xff]
    %v47 = vld [vmem:[#allocation2 + $0x8] sm:$0xff]
    %v48 = vmul.f32 %v46, %v46
    %v49 = vmul.f32 %v47, %v47
    %vm50 = vcmask 261120
    %v51 = vsel %vm50, %v48, 0.0
    %52 = vadd.xlane.f32.xlu0 %v51
    %v53 = vpop.xlane.xlu0 %52
    %v54 = vsel %vm50, %v49, 0.0
    %55 = vadd.xlane.f32.xlu0 %v54
    %v56 = vpop.xlane.xlu0 %55
    %v57 = vmul.f32 %v53, 0.03125
    %v58 = vmul.f32 %v56, 0.03125
    %v59 = vadd.f32 %v57, 1e-06
    %v60 = vadd.f32 %v58, 1e-06
    %v61 = vrsqrt.pop %v59
    %v62 = vrsqrt.pop %v60
    %v63 = vmul.f32 %v46, %v61
    %v64 = vmul.f32 %v47, %v62
    %v65 = vld [vmem:[%s1] sm:$0x1]
    %v67 = vlaneseq
    %v68 = vshrl.u32 %v67, 7
    %v69 = vsub.s32 0, %v68
    %v70 = vrot.slane %v65, %v69
    %v72 = vmul.f32 %v63, %v70
    %v73 = vmul.f32 %v64, %v70
    %v74 = vld [vmem:[#allocation5] sm:$0xff]
    %v75 = vld [vmem:[#allocation5 + $0x8] sm:$0xff]
    %v76 = vld [vmem:[#allocation5 + $0x10] sm:$0xff]
    %v77 = vld [vmem:[#allocation5 + $0x18] sm:$0xff]
    %v78 = vld [vmem:[%s3] sm:$0x1]
    %v80 = vlaneseq
    %v81 = vshrl.u32 %v80, 7
    %v82 = vsub.s32 0, %v81
    %v83 = vrot.slane %v78, %v82
    %v86 = vsel %vm50, %v72, 0
    %v89 = vsel %vm50, %v73, 0
    %91 = vmatprep.subr.mxu0 0.0
    %92 = vmatpush1.msra.mxu0 0.0
    %93 = vmatprep.subr.mxu0 0.0
    %94 = vmatpush1.msra.mxu0 0.0
    %95 = vmatprep.subr.mxu0 0.0
    %96 = vmatpush1.msra.mxu0 0.0
    %97 = vmatprep.subr.mxu0 0.0
    %98 = vmatpush1.msra.mxu0 0.0
    %99 = vmatprep.subr.mxu0 0.0
    %100 = vmatpush1.msra.mxu0 0.0
    %101 = vmatprep.subr.mxu0 0.0
    %102 = vmatpush1.msra.mxu0 0.0
    %103 = vmatprep.subr.mxu0 0.0
    %104 = vmatpush1.msra.mxu0 0.0
    %105 = vmatprep.subr.mxu0 0.0
    %106 = vmatpush1.msra.mxu0 0.0
    %107 = vmatprep.subr.mxu0 0.0
    %108 = vmatpush1.msra.mxu0 0.0
    %109 = vmatprep.subr.mxu0 0.0
    %110 = vmatpush1.msra.mxu0 0.0
    %111 = vmatprep.subr.mxu0 0.0
    %112 = vmatpush1.msra.mxu0 0.0
    %113 = vmatprep.subr.mxu0 0.0
    %114 = vmatpush1.msra.mxu0 0.0
    %115 = vmatprep.subr.mxu0 0.0
    %116 = vmatpush1.msra.mxu0 %v77
    %117 = vmatprep.subr.mxu0 0.0
    %118 = vmatpush1.msra.mxu0 %v76
    %119 = vmatprep.subr.mxu0 0.0
    %120 = vmatpush1.msra.mxu0 %v75
    %121 = vmatprep.subr.mxu0 0.0
    %122 = vmatpush1.msra.mxu0 %v74
    %123 = vmatprep.subr.mxu0 0.0
    %124 = vmatpush2.msra.mxu0 0.0
    %125 = vmatprep.subr.mxu0 0.0
    %126 = vmatpush2.msra.mxu0 0.0
    %127 = vmatprep.subr.mxu0 0.0
    %128 = vmatpush2.msra.mxu0 0.0
    %129 = vmatprep.subr.mxu0 0.0
    %130 = vmatpush2.msra.mxu0 0.0
    %131 = vmatprep.subr.mxu0 0.0
    %132 = vmatpush2.msra.mxu0 0.0
    %133 = vmatprep.subr.mxu0 0.0
    %134 = vmatpush2.msra.mxu0 0.0
    %135 = vmatprep.subr.mxu0 0.0
    %136 = vmatpush2.msra.mxu0 0.0
    %137 = vmatprep.subr.mxu0 0.0
    %138 = vmatpush2.msra.mxu0 0.0
    %139 = vmatprep.subr.mxu0 0.0
    %140 = vmatpush2.msra.mxu0 0.0
    %141 = vmatprep.subr.mxu0 0.0
    %142 = vmatpush2.msra.mxu0 0.0
    %143 = vmatprep.subr.mxu0 0.0
    %144 = vmatpush2.msra.mxu0 0.0
    %145 = vmatprep.subr.mxu0 0.0
    %146 = vmatpush2.msra.mxu0 0.0
    %147 = vmatprep.subr.mxu0 0.0
    %148 = vmatpush2.msra.mxu0 0.0
    %149 = vmatprep.subr.mxu0 0.0
    %150 = vmatpush2.msra.mxu0 0.0
    %151 = vmatprep.subr.mxu0 0.0
    %152 = vmatpush2.msra.mxu0 0.0
    %153 = vmatprep.subr.mxu0 0.0
    %154 = vmatpush2.msra.mxu0 0.0
    %155 = vmatprep.mubr.f32.mxu0 0.0
    %156 = vmatmul.mubr.f32.gmra.mxu0 %v86
    %v157 = vpop.f32.mrf.mxu0
    %v158 = vadd.f32 %v83, %v157
    %v159 = vpop.f32.mrf.mxu0
    %160 = vmatprep.mubr.f32.mxu0 0.0
    %161 = vmatmul.mubr.f32.gmra.mxu0 %v89
    %v162 = vpop.f32.mrf.mxu0
    %v163 = vadd.f32 %v83, %v162
    %v164 = vpop.f32.mrf.mxu0
    %165 = vdwg.mxu0
    %vm166 = vcmask 785408
    %167 = vst.msk [vmem:[#allocation7] sm:$0xff] %vm166, %v158
    %168 = vst.msk [vmem:[#allocation7 + $0x8] sm:$0xff] %vm166, %v163
    // Predicated region
    $region26: #{tpu_custom_call.1} parent=1 // pred_check
      _
    $region27: #{tpu_custom_call.1} parent=1 // pred_check_branch
      %170 = sbr.rel (0) target = $region29
    $region28: #{tpu_custom_call.1} parent=1 // pred_region
      %s172 = ssub.s32 256, 256
      %173 = vsyncadd [#allocation4], %s172
      %s174 = sshll.u32 [#allocation7], 4
      %s175 = int_to_ptr.vmem [resolvable:$true] %s174
      %180 = dma.vmem_to_hbm [thread:$0]  %s175, 256, %s4, [#allocation4], 128, 128, 8
    $region29: #{tpu_custom_call.1} parent=1 // pred_fallthru
      _
    // Predicated region
    $region30: #{tpu_custom_call.1} parent=1 // pred_check
      _
    $region31: #{tpu_custom_call.1} parent=1 // pred_check_branch
      %182 = sbr.rel (0) target = $region33
    $region32: #{tpu_custom_call.1} parent=1 // pred_region
      %183 = dma.done [#allocation4], 256
    $region33: #{tpu_custom_call.1} parent=1 // pred_fallthru
      _
    %184 = vsyncpa [#allocation3], 1
    %185 = vsyncpa [#allocation6], 1
    %186 = vsyncpa [#allocation4], 1

</llo_original>
